<compile_context>
chip_gen: v7x
topology: tpu7x:2x2x1
jax: 0.10.0
libtpu: 0.0.40
codegen_flags: <defaults>
</compile_context>

<pallas_src>
import jax
import jax.numpy as jnp
from jax.experimental import pallas as pl
from jax.experimental.pallas import tpu as pltpu


# --------------------------------------------------------------------------- #
# Helpers
# --------------------------------------------------------------------------- #
def _cdiv(a, b):
    return -(-a // b)


def _pad_up(n, m):
    return _cdiv(n, m) * m


def _sublane(dtype):
    itemsize = jnp.dtype(dtype).itemsize
    return max(8, 32 // max(1, itemsize))        # f32: 8, bf16: 16, int8: 32


def _padded_2d_bytes(d1, d2, dtype):
    """Padded VMEM footprint of one (..., d1, d2) tile slice."""
    return (_pad_up(d1, _sublane(dtype)) * _pad_up(d2, 128)
            * jnp.dtype(dtype).itemsize)


def _tpu_vmem_capacity():
    try:
        info = pltpu.get_tpu_info()
        cap = int(getattr(info, "vmem_capacity_bytes", 0))
        if cap > 0:
            return cap
    except Exception:
        pass
    return 64 << 20        # conservative (v7x-sized) default if query fails


# --------------------------------------------------------------------------- #
# Kernels
# --------------------------------------------------------------------------- #
def _make_se_kernel(channels_last, mm_dtype):
    """Single-pass SE kernel for (Bt, HW, C) or (Bt, C, HW) blocks."""

    def kernel(x_ref, w1t_ref, w2t_ref, o_ref):
        # x_ref:   (Bt, HW, C) if channels_last else (Bt, C, HW), native dtype
        # w1t_ref: (C, Cr)  squeeze weight, pre-transposed (mm_dtype)
        # w2t_ref: (Cr, C)  excite weight, pre-transposed (mm_dtype)
        x = x_ref[...]                                       # native dtype

        spatial_axis = 1 if channels_last else 2
        # AdaptiveAvgPool2d(1): mean over spatial, f32 accumulation,
        # no full-tile f32 copy of x.
        pooled = jnp.mean(x, axis=spatial_axis, dtype=jnp.float32)   # (Bt, C)

        # fc[0]: 1x1 conv (no bias) == (Bt,C)@(C,Cr), ReLU.  MXU gets native
        # bf16 operands when weights are bf16; accumulation stays f32.
        h = jnp.dot(pooled.astype(mm_dtype), w1t_ref[...],
                    preferred_element_type=jnp.float32)              # (Bt, Cr)
        h = jnp.maximum(h, 0.0)

        # fc[2]: 1x1 conv (no bias) == (Bt,Cr)@(Cr,C), Sigmoid.
        s = jnp.dot(h.astype(mm_dtype), w2t_ref[...],
                    preferred_element_type=jnp.float32)              # (Bt, C)
        s = jax.nn.sigmoid(s)

        scale = s.astype(x.dtype)
        if channels_last:
            o_ref[...] = x * scale[:, None, :]
        else:
            o_ref[...] = x * scale[:, :, None]

    return kernel


def _make_pool_kernel(hw, thw):
    """Fallback pass 1: spatial-chunked sum-pool into a (1, C, 1) f32 block."""
    need_mask = (hw % thw) != 0

    def kernel(x_ref, sum_ref):
        j = pl.program_id(1)

        @pl.when(j == 0)
        def _():
            sum_ref[...] = jnp.zeros_like(sum_ref)

        x = x_ref[...]                                       # (1, C, thw)
        if need_mask:
            lane = jax.lax.broadcasted_iota(jnp.int32, x.shape, 2)
            x = jnp.where(lane + j * thw < hw, x, jnp.zeros_like(x))
        sum_ref[...] += jnp.sum(x, axis=2, keepdims=True, dtype=jnp.float32)

    return kernel


def _rescale_kernel(x_ref, s_ref, o_ref):
    """Fallback pass 2: per-channel rescale of an x chunk."""
    # x_ref: (1, C, thw), s_ref: (1, C, 1) in x dtype -> lane broadcast.
    o_ref[...] = x_ref[...] * s_ref[...]


# --------------------------------------------------------------------------- #
# Wrapper
# --------------------------------------------------------------------------- #
def se_block(x_nchw, w1, w2):
    """SEBlock forward.

    x_nchw : (B, C, H, W)
    w1     : (C//r, C)   squeeze weight (Conv2d weight (Cout, Cin, 1, 1) squeezed)
    w2     : (C, C//r)   excite weight
    """
    B, C, H, W = x_nchw.shape
    Cr = w1.shape[0]
    HW = H * W
    x_dtype = x_nchw.dtype
    itemsize = jnp.dtype(x_dtype).itemsize

    # ---- generation-aware VMEM budgets --------------------------------------
    vmem_cap = _tpu_vmem_capacity()
    small_vmem = vmem_cap <= (96 << 20)          # v7x-like (64 MiB per core)
    budget = max(1 << 20, vmem_cap // 16)        # ~4 MiB (v7x) / ~8 MiB (v5e/v6e)
    vmem_clamp = (vmem_cap * 5) // 8             # ~40 MiB / ~80 MiB scoped limit

    # ---- layout: keep native (B, C, HW) unless HW is genuinely tiny ---------
    channels_last = (HW < 128) and (C > HW)

    # ---- weights: pre-transposed once; feed MXU bf16 natively if bf16 -------
    mm_dtype = jnp.bfloat16 if w1.dtype == jnp.bfloat16 else jnp.float32
    w1t = jnp.transpose(w1).astype(mm_dtype)     # (C, Cr)
    w2t = jnp.transpose(w2).astype(mm_dtype)     # (Cr, C)
    w_bytes = (_padded_2d_bytes(C, Cr, mm_dtype)
               + _padded_2d_bytes(Cr, C, mm_dtype))

    cost = pl.CostEstimate(
        flops=int(4 * B * C * Cr + 2 * B * C * HW),
        transcendentals=int(B * C),
        bytes_accessed=int(2 * x_nchw.nbytes + w1.nbytes + w2.nbytes))

    # Padded per-image VMEM footprint for the chosen block layout.
    if channels_last:
        padded_img = _padded_2d_bytes(HW, C, x_dtype)
    else:
        padded_img = _padded_2d_bytes(C, HW, x_dtype)

    # Largest single block affordable with 2x(in)+2x(out) buffering + weights.
    single_block_cap = max(budget, (vmem_clamp - 2 * w_bytes - (2 << 20)) // 4)

    # ======================================================================= #
    # Main path: one image (padded) fits in a block -> single-pass kernel.
    # ======================================================================= #
    if padded_img <= single_block_cap:
        if channels_last:
            x = jnp.transpose(x_nchw.reshape(B, C, HW), (0, 2, 1))   # tiny only
        else:
            x = x_nchw.reshape(B, C, HW)                             # free reshape

        bt = max(1, min(B, int(budget // padded_img)))
        ng = _cdiv(B, bt)
        if small_vmem:
            # v7x megacore: prefer an even grid of >= 4 steps so both cores
            # stay busy and double-buffered.
            if ng < 4 and B >= 4:
                bt = _cdiv(B, 4)
                ng = _cdiv(B, bt)
            if ng % 2 == 1 and ng < B:
                cand = bt
                while cand > 1 and _cdiv(B, cand) % 2 == 1:
                    cand -= 1
                if _cdiv(B, cand) % 2 == 0:
                    bt = cand
                    ng = _cdiv(B, bt)
        else:
            if ng < 2 and B >= 2:
                bt = _cdiv(B, 2)
                ng = _cdiv(B, bt)

        block = (bt, HW, C) if channels_last else (bt, C, HW)
        block_bytes = bt * padded_img
        vmem_bytes = int(min(vmem_clamp,
                             max(4 * block_bytes + 2 * w_bytes + (2 << 20),
                                 32 << 20)))

        out = pl.pallas_call(
            _make_se_kernel(channels_last, mm_dtype),
            out_shape=jax.ShapeDtypeStruct(x.shape, x_dtype),
            grid_spec=pltpu.PrefetchScalarGridSpec(
                num_scalar_prefetch=0,
                grid=(ng,),
                in_specs=[
                    pl.BlockSpec(block, lambda b: (b, 0, 0)),
                    pl.BlockSpec((C, Cr), lambda b: (0, 0)),
                    pl.BlockSpec((Cr, C), lambda b: (0, 0)),
                ],
                out_specs=pl.BlockSpec(block, lambda b: (b, 0, 0)),
            ),
            compiler_params=pltpu.CompilerParams(
                dimension_semantics=("parallel",),
                vmem_limit_bytes=vmem_bytes),
            cost_estimate=cost,
        )(x, w1t, w2t)

        if channels_last:
            out = jnp.transpose(out, (0, 2, 1))
        return out.reshape(B, C, H, W)

    # ======================================================================= #
    # Fallback: a single image exceeds the block budget (large C*HW, tight
    # v7x VMEM).  Two-pass: chunked pool -> tiny gate in JAX -> chunked rescale.
    # ======================================================================= #
    x = x_nchw.reshape(B, C, HW)                             # HW is large here
    row_bytes = _pad_up(C, _sublane(x_dtype)) * itemsize     # bytes per spatial col
    thw = max(128, (int(budget // max(1, row_bytes)) // 128) * 128)
    nhw = _cdiv(HW, thw)
    chunk_bytes = row_bytes * thw

    pool_vmem = int(min(vmem_clamp, max(2 * chunk_bytes + (4 << 20), 32 << 20)))
    resc_vmem = int(min(vmem_clamp, max(4 * chunk_bytes + (4 << 20), 32 << 20)))

    pooled_sum = pl.pallas_call(
        _make_pool_kernel(HW, thw),
        out_shape=jax.ShapeDtypeStruct((B, C, 1), jnp.float32),
        grid_spec=pltpu.PrefetchScalarGridSpec(
            num_scalar_prefetch=0,
            grid=(B, nhw),
            in_specs=[pl.BlockSpec((1, C, thw), lambda b, j: (b, 0, j))],
            out_specs=pl.BlockSpec((1, C, 1), lambda b, j: (b, 0, 0)),
        ),
        compiler_params=pltpu.CompilerParams(
            dimension_semantics=("parallel", "arbitrary"),
            vmem_limit_bytes=pool_vmem),
        cost_estimate=pl.CostEstimate(
            flops=int(B * C * HW), transcendentals=0,
            bytes_accessed=int(x.nbytes + B * C * 4)),
    )(x)

    # Tiny gate math ((B, C) scale) in plain JAX — negligible vs. HBM traffic.
    pooled = pooled_sum[:, :, 0] * (1.0 / HW)                # (B, C) f32
    h = jnp.maximum(jnp.dot(pooled.astype(mm_dtype), w1t,
                            preferred_element_type=jnp.float32), 0.0)
    s = jax.nn.sigmoid(jnp.dot(h.astype(mm_dtype), w2t,
                               preferred_element_type=jnp.float32))
    scale = s.astype(x_dtype).reshape(B, C, 1)

    out = pl.pallas_call(
        _rescale_kernel,
        out_shape=jax.ShapeDtypeStruct(x.shape, x_dtype),
        grid_spec=pltpu.PrefetchScalarGridSpec(
            num_scalar_prefetch=0,
            grid=(B, nhw),
            in_specs=[pl.BlockSpec((1, C, thw), lambda b, j: (b, 0, j)),
                      pl.BlockSpec((1, C, 1), lambda b, j: (b, 0, 0))],
            out_specs=pl.BlockSpec((1, C, thw), lambda b, j: (b, 0, j)),
        ),
        compiler_params=pltpu.CompilerParams(
            dimension_semantics=("parallel", "parallel"),
            vmem_limit_bytes=resc_vmem),
        cost_estimate=pl.CostEstimate(
            flops=int(B * C * HW), transcendentals=0,
            bytes_accessed=int(2 * x.nbytes)),
    )(x, scale)

    return out.reshape(B, C, H, W)


# --------------------------------------------------------------------------- #
# Reference + test
# --------------------------------------------------------------------------- #
def _reference(x, w1, w2):
    pooled = jnp.mean(x, axis=(2, 3))                        # (B, C)
    h = jnp.maximum(pooled @ w1.T, 0.0)                      # (B, Cr)
    s = jax.nn.sigmoid(h @ w2.T)                             # (B, C)
    return x * s[:, :, None, None]


if __name__ == "__main__":
    key = jax.random.PRNGKey(0)
    kx, k1, k2 = jax.random.split(key, 3)

    B, C, H, W = 2, 4, 16, 16
    reduction = 2
    Cr = C // reduction

    x = jax.random.normal(kx, (B, C, H, W), dtype=jnp.float32)
    # Conv2d(C, Cr, 1, bias=False).weight has shape (Cr, C, 1, 1) -> (Cr, C)
    w1 = jax.random.normal(k1, (Cr, C), dtype=jnp.float32) * 0.5
    # Conv2d(Cr, C, 1, bias=False).weight has shape (C, Cr, 1, 1) -> (C, Cr)
    w2 = jax.random.normal(k2, (C, Cr), dtype=jnp.float32) * 0.5

    out = se_block(x, w1, w2)
    jax.block_until_ready(out)

    ref = _reference(x, w1, w2)
    assert out.shape == (B, C, H, W)
    assert jnp.allclose(out, ref, atol=1e-5, rtol=1e-5), "mismatch vs reference"

    print("KERNEL_OK")
</pallas_src>

<mosaic_0001>
module attributes {stable_mosaic.version = 11 : i64} {
  func.func @kernel(%arg0: i32, %arg1: memref<1x4x256xf32, #tpu.memory_space<vmem>>, %arg2: memref<4x2xf32, #tpu.memory_space<vmem>>, %arg3: memref<2x4xf32, #tpu.memory_space<vmem>>, %arg4: memref<1x4x256xf32, #tpu.memory_space<vmem>>) attributes {dimension_semantics = [#tpu.dimension_semantics<parallel>], iteration_bounds = array<i64: 2>, scalar_prefetch = 0 : i64, scratch_operands = 0 : i64, tpu.core_type = #tpu.core_type<tc>, window_params = [{transform_indices = @transform_0, window_bounds = array<i64: 1, 4, 256>}, {pipeline_mode = #tpu.pipeline_mode<synchronous>, transform_indices = @transform_1, window_bounds = array<i64: 4, 2>}, {pipeline_mode = #tpu.pipeline_mode<synchronous>, transform_indices = @transform_2, window_bounds = array<i64: 2, 4>}, {transform_indices = @transform_3, window_bounds = array<i64: 1, 4, 256>}]} {
    %c0 = arith.constant 0 : index
    %c0_0 = arith.constant 0 : index
    %c0_1 = arith.constant 0 : index
    %0 = vector.load %arg1[%c0, %c0_0, %c0_1] : memref<1x4x256xf32, #tpu.memory_space<vmem>>, vector<1x4x256xf32>
    %cst = arith.constant dense<0.000000e+00> : vector<1x4xf32>
    %1 = vector.multi_reduction <add>, %0, %cst [2] : vector<1x4x256xf32> to vector<1x4xf32>
    %cst_2 = arith.constant 2.560000e+02 : f32
    %2 = vector.broadcast %cst_2 : f32 to vector<1x4xf32>
    %3 = arith.divf %1, %2 : vector<1x4xf32>
    %c0_3 = arith.constant 0 : index
    %c0_4 = arith.constant 0 : index
    %4 = vector.load %arg2[%c0_3, %c0_4] : memref<4x2xf32, #tpu.memory_space<vmem>>, vector<4x2xf32>
    %cst_5 = arith.constant dense<0.000000e+00> : vector<1x2xf32>
    %5 = tpu.matmul %3, %4, %cst_5 {dimension_numbers = #tpu.dot_dimension_numbers<[1], [0], [0], [1], [0, 0, 1, 1], [], []>} : vector<1x4xf32>, vector<4x2xf32>, vector<1x2xf32> -> vector<1x2xf32>
    %cst_6 = arith.constant 0.000000e+00 : f32
    %6 = vector.broadcast %cst_6 : f32 to vector<1x2xf32>
    %7 = arith.maximumf %5, %6 : vector<1x2xf32>
    %c0_7 = arith.constant 0 : index
    %c0_8 = arith.constant 0 : index
    %8 = vector.load %arg3[%c0_7, %c0_8] : memref<2x4xf32, #tpu.memory_space<vmem>>, vector<2x4xf32>
    %cst_9 = arith.constant dense<0.000000e+00> : vector<1x4xf32>
    %9 = tpu.matmul %7, %8, %cst_9 {dimension_numbers = #tpu.dot_dimension_numbers<[1], [0], [0], [1], [0, 0, 1, 1], [], []>} : vector<1x2xf32>, vector<2x4xf32>, vector<1x4xf32> -> vector<1x4xf32>
    %10 = arith.negf %9 : vector<1x4xf32>
    %11 = math.exp %10 : vector<1x4xf32>
    %cst_10 = arith.constant 1.000000e+00 : f32
    %12 = vector.broadcast %cst_10 : f32 to vector<1x4xf32>
    %13 = arith.addf %12, %11 : vector<1x4xf32>
    %14 = arith.divf %12, %13 : vector<1x4xf32>
    %15 = vector.shape_cast %14 : vector<1x4xf32> to vector<1x4x1xf32>
    %16 = vector.broadcast %15 : vector<1x4x1xf32> to vector<1x4x256xf32>
    %17 = arith.mulf %0, %16 : vector<1x4x256xf32>
    %c0_11 = arith.constant 0 : index
    %c0_12 = arith.constant 0 : index
    %c0_13 = arith.constant 0 : index
    %18 = vector.load %arg4[%c0_11, %c0_12, %c0_13] : memref<1x4x256xf32, #tpu.memory_space<vmem>>, vector<1x4x256xf32>
    tpu.vector_store %arg4[%c0_11, %c0_12, %c0_13], %17 {strides = array<i32>} : memref<1x4x256xf32, #tpu.memory_space<vmem>>, vector<1x4x256xf32>,
    return
  }
  func.func @transform_0(%arg0: i32) -> (i32, i32, i32) {
    %c0_i32 = arith.constant 0 : i32
    %c0_i32_0 = arith.constant 0 : i32
    %c0_i32_1 = arith.constant 0 : i32
    return %arg0, %c0_i32, %c0_i32_0 : i32, i32, i32
  }
  func.func @transform_1(%arg0: i32) -> (i32, i32) {
    %c0_i32 = arith.constant 0 : i32
    %c0_i32_0 = arith.constant 0 : i32
    %c0_i32_1 = arith.constant 0 : i32
    return %c0_i32, %c0_i32_0 : i32, i32
  }
  func.func @transform_2(%arg0: i32) -> (i32, i32) {
    %c0_i32 = arith.constant 0 : i32
    %c0_i32_0 = arith.constant 0 : i32
    %c0_i32_1 = arith.constant 0 : i32
    return %c0_i32, %c0_i32_0 : i32, i32
  }
  func.func @transform_3(%arg0: i32) -> (i32, i32, i32) {
    %c0_i32 = arith.constant 0 : i32
    %c0_i32_0 = arith.constant 0 : i32
    %c0_i32_1 = arith.constant 0 : i32
    return %arg0, %c0_i32, %c0_i32_0 : i32, i32, i32
  }
}

</mosaic_0001>

<llo_original>
// kernel: tpu_custom_call.1
$region0: #{tpu_custom_call.1}
  #allocation0 [shape = 'u32[]', space=smem, size = 0x4, offset = 0x4, fixed_abs, tag = 'smem constant byte address 0x4 - core index']
  #allocation1 [shape = 'u32[144,128]{1,0:T(1,128)}', space=vmem, size = 0x12000, scoped, tag = 'internal scratch']
  %s0 = inlined_call_operand.hbm [shape: f32[2,4,256], index: 0, kind: input, shape index: {}]
  %s1 = inlined_call_operand.vmem [shape: f32[4,2], index: 1, kind: input, shape index: {}]
  %s2 = inlined_call_operand.vmem [shape: f32[2,4], index: 2, kind: input, shape index: {}]
  %s3 = inlined_call_operand.hbm [shape: f32[2,4,256], index: 3, kind: output, shape index: {}]
  %s4 = sld [smem:[#allocation0]]
  $region49: #{tpu_custom_call.1} parent=0
    _
  %s6 = ssub.s32 1, %s4
  %s7 = scalar_select 0, %s6, %s4
  $region1: #{tpu_custom_call.1} parent=0
    #allocation2 [shape = 'u8[8192]{0}', space=vmem, size = 0x2000, scoped, tag = 'input window, operand 0']
    #allocation3 [shape = 's32[2]{0}', space=sflag, size = 0x8, scoped, tag = 'scoped memory for tpu_custom_call.1']
    #allocation4 [shape = 's32[2]{0}', space=sflag, size = 0x8, scoped, tag = 'scoped memory for tpu_custom_call.1']
    #allocation5 [shape = 'u8[8192]{0}', space=vmem, size = 0x2000, scoped, tag = 'output window, operand 0']
    %8 = vsyncpa [#allocation3], 0
    %s9 = scalar_lea.sflag [#allocation3], 1
    %10 = vsyncpa %s9, 0
    %11 = vsyncpa [#allocation4], 0
    %s12 = scalar_lea.sflag [#allocation4], 1
    %13 = vsyncpa %s12, 0
    loop: start=0, step=1, limit=4
    $region2: #{tpu_custom_call.1} parent=1 // loop_pre_header
      _
    $region3: #{tpu_custom_call.1} parent=1 // loop_header
      %s15 = sphi 0, %s19
      %p16 = scmp.ge.s32.totalorder %s15, 4
      %s25 = sphi 0, %s27
      %s28 = sphi 0, %s25
      %s29 = sphi 0, %s28
      %s45 = sphi 0, %s29
      %s49 = sphi 0, %s49
      %s51 = sphi 0, %s49
      %s52 = sphi 0, %s51
      %s66 = sphi 0, %s52
      %s70 = sphi 0, %s70
      %s72 = sphi 0, %s70
      %s73 = sphi 0, %s72
      %s87 = sphi 0, %s73
      %s93 = sphi 0, %s95
      %s96 = sphi 0, %s93
      %s97 = sphi 0, %s96
      %s113 = sphi 0, %s97
    $region4: #{tpu_custom_call.1} parent=1 // loop_header_branch
      %18 = sbr.rel (%p16) target = $region8
    $region5: #{tpu_custom_call.1} parent=1 // loop_body
      %s20 = ssub.s32 %s15, 1
      %s21 = ssub.s32 %s15, 2
      %s22 = sadd.s32 %s15, 1
      %s23 = ssub.s32 %s15, %s22
      %p24 = scmp.eq.s32.totalorder %s23, 0
      %s26 = sadd.s32 %s25, 1
      %s27 = scalar_select %p24, %s25, %s26
      %p30 = pneg %p24
      %p31 = scmp.eq.s32.totalorder %s15, 1
      %p32 = por %p30, %p31
      %p33 = scmp.ne.s32.totalorder %s25, %s28
      %p34 = scmp.eq.s32.totalorder %s15, 0
      %p35 = por %p33, %p34
      %p36 = scmp.ne.s32.totalorder %s25, %s28
      %p37 = scmp.eq.s32.totalorder %s20, 1
      %p38 = por %p36, %p37
      %p39 = scmp.ne.s32.totalorder %s28, %s29
      %p40 = scmp.eq.s32.totalorder %s20, 0
      %p41 = por %p39, %p40
      %p42 = scmp.ne.s32.totalorder %s28, %s29
      %p43 = scmp.eq.s32.totalorder %s21, 1
      %p44 = por %p42, %p43
      %p46 = scmp.ne.s32.totalorder %s29, %s45
      %p47 = scmp.eq.s32.totalorder %s21, 0
      %p48 = por %p46, %p47
      %s50 = sadd.s32 %s49, 1
      %p53 = scmp.eq.s32.totalorder %s15, 1
      %p54 = scmp.ne.s32.totalorder %s49, %s51
      %p55 = scmp.eq.s32.totalorder %s15, 0
      %p56 = por %p54, %p55
      %p57 = scmp.ne.s32.totalorder %s49, %s51
      %p58 = scmp.eq.s32.totalorder %s20, 1
      %p59 = por %p57, %p58
      %p60 = scmp.ne.s32.totalorder %s51, %s52
      %p61 = scmp.eq.s32.totalorder %s20, 0
      %p62 = por %p60, %p61
      %p63 = scmp.ne.s32.totalorder %s51, %s52
      %p64 = scmp.eq.s32.totalorder %s21, 1
      %p65 = por %p63, %p64
      %p67 = scmp.ne.s32.totalorder %s52, %s66
      %p68 = scmp.eq.s32.totalorder %s21, 0
      %p69 = por %p67, %p68
      %s71 = sadd.s32 %s70, 1
      %p74 = scmp.eq.s32.totalorder %s15, 1
      %p75 = scmp.ne.s32.totalorder %s70, %s72
      %p76 = scmp.eq.s32.totalorder %s15, 0
      %p77 = por %p75, %p76
      %p78 = scmp.ne.s32.totalorder %s70, %s72
      %p79 = scmp.eq.s32.totalorder %s20, 1
      %p80 = por %p78, %p79
      %p81 = scmp.ne.s32.totalorder %s72, %s73
      %p82 = scmp.eq.s32.totalorder %s20, 0
      %p83 = por %p81, %p82
      %p84 = scmp.ne.s32.totalorder %s72, %s73
      %p85 = scmp.eq.s32.totalorder %s21, 1
      %p86 = por %p84, %p85
      %p88 = scmp.ne.s32.totalorder %s73, %s87
      %p89 = scmp.eq.s32.totalorder %s21, 0
      %p90 = por %p88, %p89
      %s91 = ssub.s32 %s15, %s22
      %p92 = scmp.eq.s32.totalorder %s91, 0
      %s94 = sadd.s32 %s93, 1
      %s95 = scalar_select %p92, %s93, %s94
      %p98 = pneg %p92
      %p99 = scmp.eq.s32.totalorder %s15, 1
      %p100 = por %p98, %p99
      %p101 = scmp.ne.s32.totalorder %s93, %s96
      %p102 = scmp.eq.s32.totalorder %s15, 0
      %p103 = por %p101, %p102
      %p104 = scmp.ne.s32.totalorder %s93, %s96
      %p105 = scmp.eq.s32.totalorder %s20, 1
      %p106 = por %p104, %p105
      %p107 = scmp.ne.s32.totalorder %s96, %s97
      %p108 = scmp.eq.s32.totalorder %s20, 0
      %p109 = por %p107, %p108
      %p110 = scmp.ne.s32.totalorder %s96, %s97
      %p111 = scmp.eq.s32.totalorder %s21, 1
      %p112 = por %p110, %p111
      %p114 = scmp.ne.s32.totalorder %s97, %s113
      %p115 = scmp.eq.s32.totalorder %s21, 0
      %p116 = por %p114, %p115
      %p117 = scmp.le.s32.totalorder 1, %s15
      %p118 = scmp.lt.s32.totalorder %s15, 3
      %p119 = pnand %p117, %p118
      %p120 = pneg %p119
      // Predicated region
      $region9: #{tpu_custom_call.1} parent=5 // pred_check
        _
      $region10: #{tpu_custom_call.1} parent=5 // pred_check_branch
        %122 = sbr.rel (%p119) target = $region12
      $region11: #{tpu_custom_call.1} parent=5 // pred_region
        %s123 = ssub.s32 %s15, 1
        // Predicated region
        $region13: #{tpu_custom_call.1} parent=11 // pred_check
          %p124 = pneg %p62
        $region14: #{tpu_custom_call.1} parent=11 // pred_check_branch
          %126 = sbr.rel (%p124) target = $region16
        $region15: #{tpu_custom_call.1} parent=11 // pred_region
          _
        $region16: #{tpu_custom_call.1} parent=11 // pred_fallthru
          _
        // Predicated region
        $region17: #{tpu_custom_call.1} parent=11 // pred_check
          %p127 = pneg %p83
        $region18: #{tpu_custom_call.1} parent=11 // pred_check_branch
          %129 = sbr.rel (%p127) target = $region20
        $region19: #{tpu_custom_call.1} parent=11 // pred_region
          _
        $region20: #{tpu_custom_call.1} parent=11 // pred_fallthru
          _
      $region12: #{tpu_custom_call.1} parent=5 // pred_fallthru
        _
      %p130 = scmp.lt.s32.totalorder %s15, 2
      // Predicated region
      $region21: #{tpu_custom_call.1} parent=5 // pred_check
        %p131 = pneg %p130
      $region22: #{tpu_custom_call.1} parent=5 // pred_check_branch
        %133 = sbr.rel (%p131) target = $region24
      $region23: #{tpu_custom_call.1} parent=5 // pred_region
        // Predicated region
        $region25: #{tpu_custom_call.1} parent=23 // pred_check
          %p134 = pneg %p35
        $region26: #{tpu_custom_call.1} parent=23 // pred_check_branch
          %136 = sbr.rel (%p134) target = $region28
        $region27: #{tpu_custom_call.1} parent=23 // pred_region
          %s137 = sand.u32 %s25, 1
          %s138 = scalar_lea.sflag [#allocation3], %s137
          %s139 = sand.u32 %s25, 1
          %s140 = smul.addr %s139, 8
          %s141 = scalar_lea.vmem [#allocation2], %s140
          %s143 = ssub.s32 128, 128
          %144 = vsyncadd %s138, %s143
          %s145 = smul.addr %s15, 2
          %s146 = smul.addr %s145, 64
          %s147 = scalar_lea.hbm %s0, %s146
          %s149 = sshll.u32 %s141, 4
          %s150 = int_to_ptr.vmem [resolvable:$true] %s149
          %152 = dma.hbm_to_vmem [thread:$0]  %s147, 128, %s150, %s138
        $region28: #{tpu_custom_call.1} parent=23 // pred_fallthru
          _
      $region24: #{tpu_custom_call.1} parent=5 // pred_fallthru
        _
      %p153 = scmp.le.s32.totalorder 1, %s15
      %p154 = scmp.lt.s32.totalorder %s15, 3
      %p155 = pnand %p153, %p154
      %p156 = pneg %p155
      // Predicated region
      $region29: #{tpu_custom_call.1} parent=5 // pred_check
        _
      $region30: #{tpu_custom_call.1} parent=5 // pred_check_branch
        %158 = sbr.rel (%p155) target = $region32
      $region31: #{tpu_custom_call.1} parent=5 // pred_region
        %s159 = ssub.s32 %s15, 1
        %s160 = sand.u32 %s28, 1
        %s161 = scalar_lea.sflag [#allocation3], %s160
        %s162 = sand.u32 %s28, 1
        %s163 = smul.addr %s162, 8
        %s164 = scalar_lea.vmem [#allocation2], %s163
        // Predicated region
        $region33: #{tpu_custom_call.1} parent=31 // pred_check
          %p165 = pneg %p41
        $region34: #{tpu_custom_call.1} parent=31 // pred_check_branch
          %167 = sbr.rel (%p165) target = $region36
        $region35: #{tpu_custom_call.1} parent=31 // pred_region
          %168 = dma.done %s161, 128
        $region36: #{tpu_custom_call.1} parent=31 // pred_fallthru
          _
        %s169 = sand.u32 %s28, 1
        %s170 = scalar_lea.sflag [#allocation3], %s169
        %s171 = sand.u32 %s28, 1
        %s172 = smul.addr %s171, 8
        %s173 = scalar_lea.vmem [#allocation2], %s172
        %p174 = pneg %p41
        %p175 = pneg %p38
        %p176 = pneg %p62
        %p177 = pneg %p59
        %p178 = pneg %p83
        %p179 = pneg %p80
        %p180 = pneg %p109
        %p181 = pneg %p106
        %s182 = sand.u32 %s96, 1
        %s183 = scalar_lea.sflag [#allocation4], %s182
        %s184 = sand.u32 %s96, 1
        %s185 = smul.addr %s184, 8
        %s186 = scalar_lea.vmem [#allocation5], %s185
        %v187 = vld [vmem:[%s164] sm:$0xff]
        %v189 = vcombine.high %v187, %v187
        %vm191 = vcmask 1043456
        %v192 = vsel %vm191, %v187, 0.0
        %v193 = vsel %vm191, %v189, 0.0
        %v194 = vadd.f32 %v192, %v193
        %195 = vadd.xlane.f32.xlu0 %v194
        %v196 = vpop.xlane.xlu0 %195
        %v197 = vrcp.pop 256.0
        %v198 = vmul.f32 %v196, %v197
        %v199 = vld [vmem:[%s1] sm:$0xf]
        %v201 = vlaneseq
        %v202 = vand.u32 %v201, 127
        %v203 = vlaneseq
        %v204 = vshrl.u32 %v203, 7
        %v205 = vsub.s32 %v202, %v204
        %v206 = vrot.slane %v198, %v205
        %vm207 = vcmask 31744
        %v208 = vsel %vm207, %v206, 0
        %v211 = vsel %vm191, %v199, 0
        %213 = vmatprep.subr.mxu0 0.0
        %214 = vmatpush1.msra.mxu0 %v211
        %215 = vmatprep.subr.mxu0 0.0
        %216 = vmatpush1.msra.mxu0 0.0
        %217 = vmatprep.subr.mxu0 0.0
        %218 = vmatpush1.msra.mxu0 0.0
        %219 = vmatprep.subr.mxu0 0.0
        %220 = vmatpush1.msra.mxu0 0.0
        %221 = vmatprep.subr.mxu0 0.0
        %222 = vmatpush1.msra.mxu0 0.0
        %223 = vmatprep.subr.mxu0 0.0
        %224 = vmatpush1.msra.mxu0 0.0
        %225 = vmatprep.subr.mxu0 0.0
        %226 = vmatpush1.msra.mxu0 0.0
        %227 = vmatprep.subr.mxu0 0.0
        %228 = vmatpush1.msra.mxu0 0.0
        %229 = vmatprep.subr.mxu0 0.0
        %230 = vmatpush1.msra.mxu0 0.0
        %231 = vmatprep.subr.mxu0 0.0
        %232 = vmatpush1.msra.mxu0 0.0
        %233 = vmatprep.subr.mxu0 0.0
        %234 = vmatpush1.msra.mxu0 0.0
        %235 = vmatprep.subr.mxu0 0.0
        %236 = vmatpush1.msra.mxu0 0.0
        %237 = vmatprep.subr.mxu0 0.0
        %238 = vmatpush1.msra.mxu0 0.0
        %239 = vmatprep.subr.mxu0 0.0
        %240 = vmatpush1.msra.mxu0 0.0
        %241 = vmatprep.subr.mxu0 0.0
        %242 = vmatpush1.msra.mxu0 0.0
        %243 = vmatprep.subr.mxu0 0.0
        %244 = vmatpush1.msra.mxu0 0.0
        %245 = vmatprep.subr.mxu0 0.0
        %246 = vmatpush1.msra.mxu0 0.0
        %247 = vmatprep.subr.mxu0 0.0
        %248 = vmatpush1.msra.mxu0 0.0
        %249 = vmatprep.subr.mxu0 0.0
        %250 = vmatpush1.msra.mxu0 0.0
        %251 = vmatprep.subr.mxu0 0.0
        %252 = vmatpush1.msra.mxu0 0.0
        %253 = vmatprep.subr.mxu0 0.0
        %254 = vmatpush1.msra.mxu0 0.0
        %255 = vmatprep.subr.mxu0 0.0
        %256 = vmatpush1.msra.mxu0 0.0
        %257 = vmatprep.subr.mxu0 0.0
        %258 = vmatpush1.msra.mxu0 0.0
        %259 = vmatprep.subr.mxu0 0.0
        %260 = vmatpush1.msra.mxu0 0.0
        %261 = vmatprep.subr.mxu0 0.0
        %262 = vmatpush1.msra.mxu0 0.0
        %263 = vmatprep.subr.mxu0 0.0
        %264 = vmatpush1.msra.mxu0 0.0
        %265 = vmatprep.subr.mxu0 0.0
        %266 = vmatpush1.msra.mxu0 0.0
        %267 = vmatprep.subr.mxu0 0.0
        %268 = vmatpush1.msra.mxu0 0.0
        %269 = vmatprep.subr.mxu0 0.0
        %270 = vmatpush1.msra.mxu0 0.0
        %271 = vmatprep.subr.mxu0 0.0
        %272 = vmatpush1.msra.mxu0 0.0
        %273 = vmatprep.subr.mxu0 0.0
        %274 = vmatpush1.msra.mxu0 0.0
        %275 = vmatprep.subr.mxu0 0.0
        %276 = vmatpush1.msra.mxu0 0.0
        %277 = vmatprep.mubr.f32.mxu0 0.0
        %278 = vmatmul.mubr.f32.gmra.mrb[0].mxu0 %v208
        %v279 = vpop.f32.mrb[0].mxu0
        %v280 = vadd.f32 0.0, %v279
        %v281 = vpop.f32.mrb[0].mxu0
        %282 = vdwg.mxu0
        %v283 = vmax.f32 %v280, 0.0
        %v284 = vld [vmem:[%s2] sm:$0x3]
        %vm285 = vcmask 15360
        %v287 = vsel %vm285, %v283, 0
        %vm289 = vcmask 1041408
        %v291 = vsel %vm289, %v284, 0
        %293 = vmatprep.subr.mxu0 0.0
        %294 = vmatpush1.msra.mxu0 %v291
        %295 = vmatprep.subr.mxu0 0.0
        %296 = vmatpush1.msra.mxu0 0.0
        %297 = vmatprep.subr.mxu0 0.0
        %298 = vmatpush1.msra.mxu0 0.0
        %299 = vmatprep.subr.mxu0 0.0
        %300 = vmatpush1.msra.mxu0 0.0
        %301 = vmatprep.subr.mxu0 0.0
        %302 = vmatpush1.msra.mxu0 0.0
        %303 = vmatprep.subr.mxu0 0.0
        %304 = vmatpush1.msra.mxu0 0.0
        %305 = vmatprep.subr.mxu0 0.0
        %306 = vmatpush1.msra.mxu0 0.0
        %307 = vmatprep.subr.mxu0 0.0
        %308 = vmatpush1.msra.mxu0 0.0
        %309 = vmatprep.subr.mxu0 0.0
        %310 = vmatpush1.msra.mxu0 0.0
        %311 = vmatprep.subr.mxu0 0.0
        %312 = vmatpush1.msra.mxu0 0.0
        %313 = vmatprep.subr.mxu0 0.0
        %314 = vmatpush1.msra.mxu0 0.0
        %315 = vmatprep.subr.mxu0 0.0
        %316 = vmatpush1.msra.mxu0 0.0
        %317 = vmatprep.subr.mxu0 0.0
        %318 = vmatpush1.msra.mxu0 0.0
        %319 = vmatprep.subr.mxu0 0.0
        %320 = vmatpush1.msra.mxu0 0.0
        %321 = vmatprep.subr.mxu0 0.0
        %322 = vmatpush1.msra.mxu0 0.0
        %323 = vmatprep.subr.mxu0 0.0
        %324 = vmatpush1.msra.mxu0 0.0
        %325 = vmatprep.subr.mxu0 0.0
        %326 = vmatpush1.msra.mxu0 0.0
        %327 = vmatprep.subr.mxu0 0.0
        %328 = vmatpush1.msra.mxu0 0.0
        %329 = vmatprep.subr.mxu0 0.0
        %330 = vmatpush1.msra.mxu0 0.0
        %331 = vmatprep.subr.mxu0 0.0
        %332 = vmatpush1.msra.mxu0 0.0
        %333 = vmatprep.subr.mxu0 0.0
        %334 = vmatpush1.msra.mxu0 0.0
        %335 = vmatprep.subr.mxu0 0.0
        %336 = vmatpush1.msra.mxu0 0.0
        %337 = vmatprep.subr.mxu0 0.0
        %338 = vmatpush1.msra.mxu0 0.0
        %339 = vmatprep.subr.mxu0 0.0
        %340 = vmatpush1.msra.mxu0 0.0
        %341 = vmatprep.subr.mxu0 0.0
        %342 = vmatpush1.msra.mxu0 0.0
        %343 = vmatprep.subr.mxu0 0.0
        %344 = vmatpush1.msra.mxu0 0.0
        %345 = vmatprep.subr.mxu0 0.0
        %346 = vmatpush1.msra.mxu0 0.0
        %347 = vmatprep.subr.mxu0 0.0
        %348 = vmatpush1.msra.mxu0 0.0
        %349 = vmatprep.subr.mxu0 0.0
        %350 = vmatpush1.msra.mxu0 0.0
        %351 = vmatprep.subr.mxu0 0.0
        %352 = vmatpush1.msra.mxu0 0.0
        %353 = vmatprep.subr.mxu0 0.0
        %354 = vmatpush1.msra.mxu0 0.0
        %355 = vmatprep.subr.mxu0 0.0
        %356 = vmatpush1.msra.mxu0 0.0
        %357 = vmatprep.mubr.f32.mxu0 0.0
        %358 = vmatmul.mubr.f32.gmra.mrb[0].mxu0 %v287
        %v359 = vpop.f32.mrb[0].mxu0
        %v360 = vadd.f32 0.0, %v359
        %v361 = vpop.f32.mrb[0].mxu0
        %362 = vdwg.mxu0
        %v363 = vxor.u32 %v360, 2147483648
        %v364 = vmul.f32 %v363, 1.442695
        %v365 = vpow.pop %v364
        %v366 = vadd.f32 %v365, 1.0
        %v367 = vrcp.pop %v366
        %v368 = vmul.f32 1.0, %v367
        %v369 = vlaneseq
        %v370 = vshrl.u32 %v369, 7
        %v371 = vsub.s32 0, %v370
        %v372 = vrot.slane %v368, %v371
        %374 = vbcast.lane.b32.xlu0 %v372, 256
        %v375 = vpop.permute.xlu0 %374
        %v378 = vunpack.c.l.s4 839922192
        %v379 = vunpack.c.0.s8 %v378
        %v380 = vlaneseq
        %v381 = vshrl.u32 %v380, 7
        %v382 = vsub.s32 %v379, %v381
        %v383 = vrot.slane %v375, %v382
        %v385 = vmul.f32 %v187, %v383
        %386 = vst [vmem:[%s186] sm:$0xff] %v385
        %s387 = sand.u32 %s96, 1
        %s388 = scalar_lea.sflag [#allocation4], %s387
        %s389 = sand.u32 %s96, 1
        %s390 = smul.addr %s389, 8
        %s391 = scalar_lea.vmem [#allocation5], %s390
        // Predicated region
        $region37: #{tpu_custom_call.1} parent=31 // pred_check
          %p392 = pneg %p106
        $region38: #{tpu_custom_call.1} parent=31 // pred_check_branch
          %394 = sbr.rel (%p392) target = $region40
        $region39: #{tpu_custom_call.1} parent=31 // pred_region
          %s396 = ssub.s32 128, 128
          %397 = vsyncadd %s388, %s396
          %s398 = smul.addr %s20, 2
          %s399 = smul.addr %s398, 64
          %s400 = scalar_lea.hbm %s3, %s399
          %s402 = sshll.u32 %s391, 4
          %s403 = int_to_ptr.vmem [resolvable:$true] %s402
          %405 = dma.vmem_to_hbm [thread:$0]  %s403, 128, %s400, %s388
        $region40: #{tpu_custom_call.1} parent=31 // pred_fallthru
          _
      $region32: #{tpu_custom_call.1} parent=5 // pred_fallthru
        _
      %p406 = scmp.le.s32.totalorder 2, %s15
      // Predicated region
      $region41: #{tpu_custom_call.1} parent=5 // pred_check
        %p407 = pneg %p406
      $region42: #{tpu_custom_call.1} parent=5 // pred_check_branch
        %409 = sbr.rel (%p407) target = $region44
      $region43: #{tpu_custom_call.1} parent=5 // pred_region
        %s410 = ssub.s32 %s15, 2
        // Predicated region
        $region45: #{tpu_custom_call.1} parent=43 // pred_check
          %p411 = pneg %p112
        $region46: #{tpu_custom_call.1} parent=43 // pred_check_branch
          %413 = sbr.rel (%p411) target = $region48
        $region47: #{tpu_custom_call.1} parent=43 // pred_region
          %s414 = sand.u32 %s97, 1
          %s415 = scalar_lea.sflag [#allocation4], %s414
          %s416 = sand.u32 %s97, 1
          %s417 = smul.addr %s416, 8
          %s418 = scalar_lea.vmem [#allocation5], %s417
          %419 = dma.done %s415, 128
        $region48: #{tpu_custom_call.1} parent=43 // pred_fallthru
          _
      $region44: #{tpu_custom_call.1} parent=5 // pred_fallthru
        _
    $region6: #{tpu_custom_call.1} parent=1 // loop_footer
      %s19 = sadd.s32 1, %s15
    $region7: #{tpu_custom_call.1} parent=1 // loop_footer_branch
      %14 = sbr.rel target = $region3
    $region8: #{tpu_custom_call.1} parent=1 // loop_exit
      _
    %420 = vsyncpa [#allocation3], 1
    %s421 = scalar_lea.sflag [#allocation3], 1
    %422 = vsyncpa %s421, 1
    %423 = vsyncpa [#allocation4], 1
    %s424 = scalar_lea.sflag [#allocation4], 1
    %425 = vsyncpa %s424, 1

</llo_original>
